<compile_context>
chip_gen: v7x
topology: tpu7x:2x2x1
jax: 0.10.0
libtpu: 0.0.40
codegen_flags: <defaults>
</compile_context>

<pallas_src>
import functools

import jax
import jax.numpy as jnp
from jax.experimental import pallas as pl
from jax.experimental.pallas import tpu as pltpu

LANES = 128
BLOCK_BYTE_BUDGET = 4 * 1024 * 1024  # per-input VMEM block (largest dtype)


def _round_up(a, b):
    return ((a + b - 1) // b) * b


def _cdiv(a, b):
    return (a + b - 1) // b


def _sublane_align(dtype):
    # Native sublane tiling: f32 -> 8, bf16/f16 -> 16, int8/fp8 -> 32.
    return {4: 8, 2: 16, 1: 32}.get(jnp.dtype(dtype).itemsize, 8)


def _tensorcores_per_device():
    """2 for chips exposing two TensorCores behind one JAX device."""
    try:
        kind = jax.devices()[0].device_kind.lower()
    except Exception:
        return 1
    if "lite" in kind or "v5e" in kind or "v6" in kind:
        return 1                      # v5e / v6e: single TensorCore
    if any(tag in kind for tag in ("v4", "v5p", "v5", "v7")):
        return 2                      # megacore (v4/v5p) or v7x: 2 TCs
    return 1


def _svm_loss_kernel(x_ref, t_ref, out_ref, *, margin, row_tile,
                     steps_per_part, total_blocks, rows_in_last,
                     needs_tail_mask, has_dup):
    part = pl.program_id(0)
    step = pl.program_id(1)

    @pl.when(step == 0)
    def _init():
        out_ref[...] = jnp.zeros_like(out_ref)

    def accumulate(mask_rows):
        x = x_ref[...].astype(jnp.float32)
        t = t_ref[...].astype(jnp.float32)
        # target.data[target.data < 0.1] = -1
        t = jnp.where(t < jnp.float32(0.1), jnp.float32(-1.0), t)
        # error = margin - x * target ; loss = clamp(error, min=0)
        hinge = jnp.maximum(jnp.float32(margin) - x * t, jnp.float32(0.0))
        if mask_rows:
            # Only the final (partial) block pays for this mask.  A true
            # select keeps unspecified out-of-bounds rows (possibly NaN/Inf)
            # out of the accumulator; indices are block-local int32 (no
            # overflow risk).
            row_ids = jax.lax.broadcasted_iota(jnp.int32, (row_tile, LANES), 0)
            hinge = jnp.where(row_ids < rows_in_last, hinge, jnp.float32(0.0))
        # Vreg-shaped partial sums: the row-major reshape groups rows into
        # (8,128) vregs; the axis-0 sum is pure VPU adds into the resident
        # output block (no scalar / cross-lane reduce in the hot loop).
        out_ref[...] += jnp.sum(hinge.reshape(row_tile // 8, 8, LANES), axis=0)

    if not needs_tail_mask and not has_dup:
        # Hot path: every grid step is a distinct, fully-valid block; no
        # masking and no conditionals at all.
        accumulate(mask_rows=False)
    else:
        blk = part * steps_per_part + step
        last = total_blocks - 1

        @pl.when(blk < last)
        def _full():
            accumulate(mask_rows=False)

        @pl.when(blk == last)
        def _tail():
            accumulate(mask_rows=needs_tail_mask)
        # blk > last: clamped duplicate steps of the non-final part
        # contribute nothing (their DMA re-reads the last block, skipped).


def svm_loss(x, target, margin=1.0, *, block_bytes=BLOCK_BYTE_BUDGET,
             num_parts=None):
    """Pallas TPU implementation of SVMLoss.forward (size_average=True)."""
    assert x.shape == target.shape
    n_elem = int(x.size)

    x_flat = x.reshape(-1)
    t_flat = target.reshape(-1)

    # Sentinel lane padding (< 128 elements, tiny copy): x_pad * t_pad >
    # margin, so padded elements give hinge == 0 exactly and never need an
    # in-kernel per-element mask.
    if n_elem % LANES != 0:
        pad = _round_up(n_elem, LANES) - n_elem
        x_flat = jnp.pad(x_flat, (0, pad),
                         constant_values=abs(float(margin)) + 1.0)
        t_flat = jnp.pad(t_flat, (0, pad), constant_values=1.0)

    rows = x_flat.size // LANES
    x2d = x_flat.reshape(rows, LANES)
    t2d = t_flat.reshape(rows, LANES)

    # Byte-budget tile: size each block by bytes (not rows) so bf16 inputs get
    # 2x the rows and every generation stays at the same HBM-roofline fraction.
    sub = max(_sublane_align(x2d.dtype), _sublane_align(t2d.dtype))
    itemsize = max(jnp.dtype(x2d.dtype).itemsize, jnp.dtype(t2d.dtype).itemsize)
    budget_rows = max(sub, (block_bytes // (LANES * itemsize)) // sub * sub)
    row_tile = int(min(budget_rows, _round_up(rows, sub)))

    total_blocks = _cdiv(rows, row_tile)

    # Split the reduction into 2 partial sums only where a real second
    # TensorCore exists behind this JAX device (v4/v5p/v7x).
    if num_parts is None:
        num_parts = _tensorcores_per_device()
    num_parts = 2 if (num_parts >= 2 and total_blocks >= 2) else 1

    steps_per_part = _cdiv(total_blocks, num_parts)
    has_dup = num_parts * steps_per_part > total_blocks

    needs_tail_mask = (rows % row_tile) != 0
    rows_in_last = rows - (total_blocks - 1) * row_tile

    if has_dup:
        # Clamp duplicate trailing steps onto the last valid block; the
        # kernel skips them (blk > last), so they are never double-counted.
        def in_map(c, i):
            return (jnp.minimum(c * steps_per_part + i, total_blocks - 1), 0)
    else:
        def in_map(c, i):
            return (c * steps_per_part + i, 0)

    kernel = functools.partial(
        _svm_loss_kernel,
        margin=float(margin),
        row_tile=row_tile,
        steps_per_part=steps_per_part,
        total_blocks=total_blocks,
        rows_in_last=int(rows_in_last),
        needs_tail_mask=bool(needs_tail_mask),
        has_dup=bool(has_dup),
    )

    partials = pl.pallas_call(
        kernel,
        out_shape=jax.ShapeDtypeStruct((num_parts * 8, LANES), jnp.float32),
        grid_spec=pltpu.PrefetchScalarGridSpec(
            num_scalar_prefetch=0,
            grid=(num_parts, steps_per_part),
            in_specs=[
                pl.BlockSpec((row_tile, LANES), in_map),
                pl.BlockSpec((row_tile, LANES), in_map),
            ],
            out_specs=pl.BlockSpec((8, LANES), lambda c, i: (c, 0)),
        ),
        compiler_params=pltpu.CompilerParams(
            dimension_semantics=("parallel", "arbitrary"),
            vmem_limit_bytes=32 * 1024 * 1024,
        ),
    )(x2d, t2d)

    # size_average=True -> mean over all (true) elements.
    return jnp.sum(partials) / jnp.float32(n_elem)


def svm_loss_ref(x, target, margin=1.0):
    xf = x.astype(jnp.float32)
    tf = target.astype(jnp.float32)
    tf = jnp.where(tf < 0.1, -1.0, tf)
    return jnp.mean(jnp.maximum(margin - xf * tf, 0.0))


if __name__ == "__main__":
    key = jax.random.PRNGKey(0)
    kx, kt = jax.random.split(key)

    # 1) Canonical small NCHW f32 case (lane-aligned, single block).
    x = jax.random.normal(kx, (2, 4, 16, 16), dtype=jnp.float32)
    target = (jax.random.uniform(kt, (2, 4, 16, 16)) > 0.5).astype(jnp.float32)
    loss = jax.block_until_ready(svm_loss(x, target, margin=1.0))
    ref = svm_loss_ref(x, target, margin=1.0)
    assert jnp.allclose(loss, ref, rtol=1e-5, atol=1e-5), (loss, ref)

    # 2) Non-lane-aligned element count (sentinel lane pad + row-tail mask).
    x2 = jax.random.normal(kx, (3, 5, 7, 7), dtype=jnp.float32)
    t2 = (jax.random.uniform(kt, (3, 5, 7, 7)) > 0.5).astype(jnp.float32)
    loss2 = jax.block_until_ready(svm_loss(x2, t2, margin=1.0))
    ref2 = svm_loss_ref(x2, t2, margin=1.0)
    assert jnp.allclose(loss2, ref2, rtol=1e-5, atol=1e-5), (loss2, ref2)

    # 3) bf16 scores, f32 targets (no wrapper upcast; byte-budget row tile).
    x3 = x.astype(jnp.bfloat16)
    loss3 = jax.block_until_ready(svm_loss(x3, target, margin=1.0))
    ref3 = svm_loss_ref(x3, target, margin=1.0)
    assert jnp.allclose(loss3, ref3, rtol=1e-4, atol=1e-4), (loss3, ref3)

    # 4) Multi-block grid with a partial final block and a forced 2-part split
    #    (exercises clamped duplicate steps, per-part partial sums, and the
    #    last-block-only row mask) using a tiny block budget to keep it small.
    x4 = jax.random.normal(kx, (2, 3, 37, 53), dtype=jnp.float32)
    t4 = (jax.random.uniform(kt, (2, 3, 37, 53)) > 0.5).astype(jnp.float32)
    loss4 = jax.block_until_ready(
        svm_loss(x4, t4, margin=1.0, block_bytes=16 * 1024, num_parts=2))
    ref4 = svm_loss_ref(x4, t4, margin=1.0)
    assert jnp.allclose(loss4, ref4, rtol=1e-5, atol=1e-5), (loss4, ref4)

    print("KERNEL_OK")
</pallas_src>

<mosaic_0001>
module attributes {stable_mosaic.version = 11 : i64} {
  func.func @_svm_loss_kernel(%arg0: i32, %arg1: i32, %arg2: memref<16x128xf32, #tpu.memory_space<vmem>>, %arg3: memref<16x128xf32, #tpu.memory_space<vmem>>, %arg4: memref<8x128xf32, #tpu.memory_space<vmem>>) attributes {dimension_semantics = [#tpu.dimension_semantics<parallel>, #tpu.dimension_semantics<arbitrary>], iteration_bounds = array<i64: 1, 1>, scalar_prefetch = 0 : i64, scratch_operands = 0 : i64, tpu.core_type = #tpu.core_type<tc>, window_params = [{transform_indices = @transform_0, window_bounds = array<i64: 16, 128>}, {transform_indices = @transform_1, window_bounds = array<i64: 16, 128>}, {transform_indices = @transform_2, window_bounds = array<i64: 8, 128>}]} {
    %c0_i32 = arith.constant 0 : i32
    %0 = arith.cmpi eq, %arg1, %c0_i32 : i32
    %1 = arith.extui %0 : i1 to i32
    %c0_i32_0 = arith.constant 0 : i32
    %2 = arith.cmpi ne, %1, %c0_i32_0 : i32
    scf.if %2 {
      %cst_12 = arith.constant 0.000000e+00 : f32
      %19 = vector.broadcast %cst_12 : f32 to vector<8x128xf32>
      %c0_13 = arith.constant 0 : index
      %c0_14 = arith.constant 0 : index
      %20 = vector.load %arg4[%c0_13, %c0_14] : memref<8x128xf32, #tpu.memory_space<vmem>>, vector<8x128xf32>
      tpu.vector_store %arg4[%c0_13, %c0_14], %19 {strides = array<i32>} : memref<8x128xf32, #tpu.memory_space<vmem>>, vector<8x128xf32>,
    } else {
    }
    %c0 = arith.constant 0 : index
    %c0_1 = arith.constant 0 : index
    %3 = vector.load %arg2[%c0, %c0_1] : memref<16x128xf32, #tpu.memory_space<vmem>>, vector<16x128xf32>
    %c0_2 = arith.constant 0 : index
    %c0_3 = arith.constant 0 : index
    %4 = vector.load %arg3[%c0_2, %c0_3] : memref<16x128xf32, #tpu.memory_space<vmem>>, vector<16x128xf32>
    %cst = arith.constant 1.000000e-01 : f32
    %5 = vector.broadcast %cst : f32 to vector<16x128xf32>
    %6 = arith.cmpf olt, %4, %5 : vector<16x128xf32>
    %cst_4 = arith.constant -1.000000e+00 : f32
    %7 = vector.broadcast %cst_4 : f32 to vector<16x128xf32>
    %8 = arith.select %6, %7, %4 : vector<16x128xi1>, vector<16x128xf32>
    %9 = arith.mulf %3, %8 : vector<16x128xf32>
    %cst_5 = arith.constant 1.000000e+00 : f32
    %10 = vector.broadcast %cst_5 : f32 to vector<16x128xf32>
    %11 = arith.subf %10, %9 : vector<16x128xf32>
    %cst_6 = arith.constant 0.000000e+00 : f32
    %12 = vector.broadcast %cst_6 : f32 to vector<16x128xf32>
    %13 = arith.maximumf %11, %12 : vector<16x128xf32>
    %c0_7 = arith.constant 0 : index
    %c0_8 = arith.constant 0 : index
    %14 = vector.load %arg4[%c0_7, %c0_8] : memref<8x128xf32, #tpu.memory_space<vmem>>, vector<8x128xf32>
    %15 = vector.shape_cast %13 : vector<16x128xf32> to vector<2x8x128xf32>
    %cst_9 = arith.constant dense<0.000000e+00> : vector<8x128xf32>
    %16 = vector.multi_reduction <add>, %15, %cst_9 [0] : vector<2x8x128xf32> to vector<8x128xf32>
    %17 = arith.addf %14, %16 : vector<8x128xf32>
    %c0_10 = arith.constant 0 : index
    %c0_11 = arith.constant 0 : index
    %18 = vector.load %arg4[%c0_10, %c0_11] : memref<8x128xf32, #tpu.memory_space<vmem>>, vector<8x128xf32>
    tpu.vector_store %arg4[%c0_10, %c0_11], %17 {strides = array<i32>} : memref<8x128xf32, #tpu.memory_space<vmem>>, vector<8x128xf32>,
    return
  }
  func.func @transform_0(%arg0: i32, %arg1: i32) -> (i32, i32) {
    %c1_i32 = arith.constant 1 : i32
    %0 = arith.muli %arg0, %c1_i32 : i32
    %1 = arith.addi %0, %arg1 : i32
    %c0_i32 = arith.constant 0 : i32
    %c0_i32_0 = arith.constant 0 : i32
    return %1, %c0_i32 : i32, i32
  }
  func.func @transform_1(%arg0: i32, %arg1: i32) -> (i32, i32) {
    %c1_i32 = arith.constant 1 : i32
    %0 = arith.muli %arg0, %c1_i32 : i32
    %1 = arith.addi %0, %arg1 : i32
    %c0_i32 = arith.constant 0 : i32
    %c0_i32_0 = arith.constant 0 : i32
    return %1, %c0_i32 : i32, i32
  }
  func.func @transform_2(%arg0: i32, %arg1: i32) -> (i32, i32) {
    %c0_i32 = arith.constant 0 : i32
    %c0_i32_0 = arith.constant 0 : i32
    return %arg0, %c0_i32 : i32, i32
  }
}

</mosaic_0001>

<llo_original>
// kernel: tpu_custom_call.1
$region0: #{tpu_custom_call.1}
  #allocation0 [shape = 'u32[]', space=smem, size = 0x4, offset = 0x4, fixed_abs, tag = 'smem constant byte address 0x4 - core index']
  #allocation1 [shape = 'u32[144,128]{1,0:T(1,128)}', space=vmem, size = 0x12000, scoped, tag = 'internal scratch']
  %s0 = inlined_call_operand.hbm [shape: f32[16,128], index: 0, kind: input, shape index: {}]
  %s1 = inlined_call_operand.hbm [shape: f32[16,128], index: 1, kind: input, shape index: {}]
  %s2 = inlined_call_operand.hbm [shape: f32[8,128], index: 2, kind: output, shape index: {}]
  %s3 = sld [smem:[#allocation0]]
  $region30: #{tpu_custom_call.1} parent=0
    _
  %s5 = ssub.s32 1, %s3
  %s6 = scalar_select 0, %s5, %s3
  $region1: #{tpu_custom_call.1} parent=0
    #allocation2 [shape = 'u8[8192]{0}', space=vmem, size = 0x2000, scoped, tag = 'input window, operand 0, single buffered']
    #allocation3 [shape = 's32[1]{0}', space=sflag, size = 0x4, scoped, tag = 'scoped memory for tpu_custom_call.1']
    #allocation4 [shape = 's32[1]{0}', space=sflag, size = 0x4, scoped, tag = 'scoped memory for tpu_custom_call.1']
    #allocation5 [shape = 'u8[8192]{0}', space=vmem, size = 0x2000, scoped, tag = 'input window, operand 1, single buffered']
    #allocation6 [shape = 's32[1]{0}', space=sflag, size = 0x4, scoped, tag = 'scoped memory for tpu_custom_call.1']
    #allocation7 [shape = 'u8[4096]{0}', space=vmem, size = 0x1000, scoped, tag = 'output window, operand 0, single buffered']
    %7 = vsyncpa [#allocation3], 0
    %8 = vsyncpa [#allocation6], 0
    %9 = vsyncpa [#allocation4], 0
    // Predicated region
    $region2: #{tpu_custom_call.1} parent=1 // pred_check
      _
    $region3: #{tpu_custom_call.1} parent=1 // pred_check_branch
      %11 = sbr.rel (0) target = $region5
    $region4: #{tpu_custom_call.1} parent=1 // pred_region
      %s12 = sadd.s32 0, 0
      %s13 = smul.u32 2, %s12
      %s15 = ssub.s32 256, 256
      %16 = vsyncadd [#allocation3], %s15
      %s17 = smul.addr %s13, 128
      %s18 = scalar_lea.hbm %s0, %s17
      %s19 = sshll.u32 [#allocation2], 4
      %s20 = int_to_ptr.vmem [resolvable:$true] %s19
      %25 = dma.hbm_to_vmem [thread:$0]  %s18, 256, %s20, [#allocation3], 128, 128, 8
    $region5: #{tpu_custom_call.1} parent=1 // pred_fallthru
      _
    // Predicated region
    $region6: #{tpu_custom_call.1} parent=1 // pred_check
      _
    $region7: #{tpu_custom_call.1} parent=1 // pred_check_branch
      %27 = sbr.rel (0) target = $region9
    $region8: #{tpu_custom_call.1} parent=1 // pred_region
      %s28 = sadd.s32 0, 0
      %s29 = smul.u32 2, %s28
      %s31 = ssub.s32 256, 256
      %32 = vsyncadd [#allocation6], %s31
      %s33 = smul.addr %s29, 128
      %s34 = scalar_lea.hbm %s1, %s33
      %s35 = sshll.u32 [#allocation5], 4
      %s36 = int_to_ptr.vmem [resolvable:$true] %s35
      %41 = dma.hbm_to_vmem [thread:$0]  %s34, 256, %s36, [#allocation6], 128, 128, 8
    $region9: #{tpu_custom_call.1} parent=1 // pred_fallthru
      _
    // Predicated region
    $region10: #{tpu_custom_call.1} parent=1 // pred_check
      _
    $region11: #{tpu_custom_call.1} parent=1 // pred_check_branch
      %43 = sbr.rel (0) target = $region13
    $region12: #{tpu_custom_call.1} parent=1 // pred_region
      %44 = dma.done [#allocation3], 256
    $region13: #{tpu_custom_call.1} parent=1 // pred_fallthru
      _
    // Predicated region
    $region14: #{tpu_custom_call.1} parent=1 // pred_check
      _
    $region15: #{tpu_custom_call.1} parent=1 // pred_check_branch
      %46 = sbr.rel (0) target = $region17
    $region16: #{tpu_custom_call.1} parent=1 // pred_region
      %47 = dma.done [#allocation6], 256
    $region17: #{tpu_custom_call.1} parent=1 // pred_fallthru
      _
    %s48 = sadd.s32 0, 0
    %s49 = smul.u32 2, %s48
    %s50 = sadd.s32 0, 0
    %s51 = smul.u32 2, %s50
    %p52 = scmp.eq.s32.totalorder 0, 0
    // Predicated region
    $region18: #{tpu_custom_call.1} parent=1 // pred_check
      %p53 = pneg %p52
    $region19: #{tpu_custom_call.1} parent=1 // pred_check_branch
      %55 = sbr.rel (%p53) target = $region21
    $region20: #{tpu_custom_call.1} parent=1 // pred_region
      %56 = vst [vmem:[#allocation7] sm:$0xff] 0.0
    $region21: #{tpu_custom_call.1} parent=1 // pred_fallthru
      _
    %v57 = vld [vmem:[#allocation2] sm:$0xff]
    %v58 = vld [vmem:[#allocation2 + $0x8] sm:$0xff]
    %v59 = vld [vmem:[#allocation5] sm:$0xff]
    %v60 = vld [vmem:[#allocation5 + $0x8] sm:$0xff]
    %vm61 = vcmp.lt.f32.partialorder %v59, 0.1
    %vm62 = vcmp.lt.f32.partialorder %v60, 0.1
    %v63 = vsel %vm61, -1.0, %v59
    %v64 = vsel %vm62, -1.0, %v60
    %v65 = vmul.f32 %v57, %v63
    %v66 = vmul.f32 %v58, %v64
    %v67 = vsub.f32 1.0, %v65
    %v68 = vsub.f32 1.0, %v66
    %v69 = vmax.f32 %v67, 0.0
    %v70 = vmax.f32 %v68, 0.0
    %v71 = vld [vmem:[#allocation7] sm:$0xff]
    %v72 = vadd.f32 %v69, %v70
    %v73 = vadd.f32 %v71, %v72
    %74 = vst [vmem:[#allocation7] sm:$0xff] %v73
    // Predicated region
    $region22: #{tpu_custom_call.1} parent=1 // pred_check
      _
    $region23: #{tpu_custom_call.1} parent=1 // pred_check_branch
      %76 = sbr.rel (0) target = $region25
    $region24: #{tpu_custom_call.1} parent=1 // pred_region
      %s78 = ssub.s32 128, 128
      %79 = vsyncadd [#allocation4], %s78
      %s81 = sshll.u32 [#allocation7], 4
      %s82 = int_to_ptr.vmem [resolvable:$true] %s81
      %84 = dma.vmem_to_hbm [thread:$0]  %s82, 128, %s2, [#allocation4]
    $region25: #{tpu_custom_call.1} parent=1 // pred_fallthru
      _
    // Predicated region
    $region26: #{tpu_custom_call.1} parent=1 // pred_check
      _
    $region27: #{tpu_custom_call.1} parent=1 // pred_check_branch
      %86 = sbr.rel (0) target = $region29
    $region28: #{tpu_custom_call.1} parent=1 // pred_region
      %87 = dma.done [#allocation4], 128
    $region29: #{tpu_custom_call.1} parent=1 // pred_fallthru
      _
    %88 = vsyncpa [#allocation3], 1
    %89 = vsyncpa [#allocation6], 1
    %90 = vsyncpa [#allocation4], 1

</llo_original>
